<compile_context>
chip_gen: v6e
topology: v6e:2x2x1
jax: 0.10.0
libtpu: 0.0.40
codegen_flags: <defaults>
</compile_context>

<pallas_src>
import functools

import jax
import jax.numpy as jnp
from jax.experimental import pallas as pl
from jax.experimental.pallas import tpu as pltpu

LANE = 128
SUBLANE = 8


def _round_up(n: int, m: int) -> int:
    return ((n + m - 1) // m) * m


def _nbytes(shape, dtype) -> int:
    n = 1
    for s in shape:
        n *= int(s)
    return n * jnp.dtype(dtype).itemsize


def gru_cell_kernel(x_ref, h_ref, w_i_ref, w_h_ref, b_i_ref, b_hn_ref,
                    out_ref, *, hidden: int):
    """One GRU step on a (tm, *) row tile.

    Fused weight layout: gate g lives at lanes [g*hidden, (g+1)*hidden) of the
    (.., GW) matmul results, GW = round_up(3*hidden, 128).
    """
    H = hidden
    mm_dtype = w_i_ref.dtype                      # bf16 in the fast path
    h32 = h_ref[...].astype(jnp.float32)          # carried state stays f32

    # Two fused MXU matmuls (instead of six per-gate ones); f32 accumulation.
    xw = jnp.dot(x_ref[...].astype(mm_dtype), w_i_ref[...],
                 preferred_element_type=jnp.float32) + b_i_ref[...]
    hw = jnp.dot(h_ref[...].astype(mm_dtype), w_h_ref[...],
                 preferred_element_type=jnp.float32)

    # All gate math in f32 (v5e has no bf16 VPU/EUP).
    r = jax.nn.sigmoid(xw[:, 0 * H:1 * H] + hw[:, 0 * H:1 * H])
    z = jax.nn.sigmoid(xw[:, 1 * H:2 * H] + hw[:, 1 * H:2 * H])
    n = jnp.tanh(xw[:, 2 * H:3 * H] + r * (hw[:, 2 * H:3 * H] + b_hn_ref[...]))

    # (1 - z) * n + z * h  ==  n + z * (h - n)   (one VPU op fewer)
    out_ref[...] = (n + z * (h32 - n)).astype(out_ref.dtype)


def pack_gru_params(params, matmul_dtype=jnp.float32):
    """One-time param transform (do this OUTSIDE the hot loop).

    Input: (W_ir, W_iz, W_in, W_hr, W_hz, W_hn, b_ir, b_iz, b_in, b_hn) with
    weights stored as (in_features, out_features) and biases as (1, hidden).
    Output: fused (W_i, W_h, b_i, b_hn) where gate g occupies columns
    [g*H, (g+1)*H) and the total width is padded to a multiple of 128 lanes.
    Weights are cast to `matmul_dtype` (use jnp.bfloat16 for MXU-native
    throughput and half the weight HBM/VMEM traffic); biases stay f32.
    """
    W_ir, W_iz, W_in, W_hr, W_hz, W_hn, b_ir, b_iz, b_in, b_hn = params
    I, H = W_ir.shape
    GW = _round_up(3 * H, LANE)

    W_i = jnp.zeros((I, GW), jnp.float32)
    W_h = jnp.zeros((H, GW), jnp.float32)
    b_i = jnp.zeros((1, GW), jnp.float32)
    gates = ((W_ir, W_hr, b_ir), (W_iz, W_hz, b_iz), (W_in, W_hn, b_in))
    for g, (wi, wh, bi) in enumerate(gates):
        W_i = W_i.at[:, g * H:(g + 1) * H].set(wi)
        W_h = W_h.at[:, g * H:(g + 1) * H].set(wh)
        b_i = b_i.at[:, g * H:(g + 1) * H].set(bi)

    return (W_i.astype(matmul_dtype), W_h.astype(matmul_dtype),
            b_i, b_hn.astype(jnp.float32))


@functools.partial(jax.jit, static_argnames=("block_b", "alias_carry"))
def my_gru_cell(x, h, packed_params, *, block_b=256, alias_carry=False):
    """Single GRU step. x: (B, input_size) f32, h: (B, hidden_size) f32.
    packed_params comes from pack_gru_params().  Set alias_carry=True inside a
    rollout so the hidden-state HBM buffer is updated in place."""
    W_i, W_h, b_i, b_hn = packed_params
    B, I = x.shape
    H = h.shape[1]
    GW = W_i.shape[1]

    # Batch tiling: a single full-batch tile when it fits (no padding, block
    # dim == full array dim is always legal); otherwise 8-aligned row tiles.
    if B <= block_b:
        tm, BP = B, B
    else:
        tm = _round_up(block_b, SUBLANE)
        BP = _round_up(B, tm)
    if BP != B:
        # Rare path; for rollouts hoist this pad outside the time loop.
        x = jnp.pad(x, ((0, BP - B), (0, 0)))
        h = jnp.pad(h, ((0, BP - B), (0, 0)))

    kernel = functools.partial(gru_cell_kernel, hidden=H)

    # Advisory cost for XLA's scheduler.
    flops = 2 * BP * (I + H) * GW + 10 * BP * H
    bytes_accessed = (_nbytes((BP, I), x.dtype) + 2 * _nbytes((BP, H), h.dtype)
                      + _nbytes(W_i.shape, W_i.dtype)
                      + _nbytes(W_h.shape, W_h.dtype)
                      + _nbytes(b_i.shape, b_i.dtype)
                      + _nbytes(b_hn.shape, b_hn.dtype))

    # Explicit VMEM budget: resident fused weights (x2 double-buffer headroom;
    # constant index_maps mean they are not re-DMA'd between row tiles), x2
    # streamed x/h/out tiles, plus f32 matmul temps (xw, hw) and slack.
    resident = (_nbytes(W_i.shape, W_i.dtype) + _nbytes(W_h.shape, W_h.dtype)
                + _nbytes(b_i.shape, b_i.dtype) + _nbytes(b_hn.shape, b_hn.dtype))
    streamed = _nbytes((tm, I), x.dtype) + 2 * _nbytes((tm, H), h.dtype)
    temps = 4 * tm * GW * 4
    vmem_limit = max(2 * resident + 2 * streamed + temps + (2 << 20), 32 << 20)

    out = pl.pallas_call(
        kernel,
        out_shape=jax.ShapeDtypeStruct((BP, H), h.dtype),
        grid=(BP // tm,),
        in_specs=[
            pl.BlockSpec((tm, I), lambda m: (m, 0)),     # x row tile
            pl.BlockSpec((tm, H), lambda m: (m, 0)),     # h row tile
            pl.BlockSpec((I, GW), lambda m: (0, 0)),     # fused W_i (resident)
            pl.BlockSpec((H, GW), lambda m: (0, 0)),     # fused W_h (resident)
            pl.BlockSpec((1, GW), lambda m: (0, 0)),     # fused input bias (f32)
            pl.BlockSpec((1, H), lambda m: (0, 0)),      # b_hn (f32)
        ],
        out_specs=pl.BlockSpec((tm, H), lambda m: (m, 0)),
        input_output_aliases=({1: 0} if alias_carry else {}),
        compiler_params=pltpu.CompilerParams(
            dimension_semantics=("parallel",),           # pltpu.CORE_PARALLEL on v7x when BP//tm >= 2
            vmem_limit_bytes=int(vmem_limit)),
        cost_estimate=pl.CostEstimate(
            flops=flops,
            transcendentals=3 * BP * H,
            bytes_accessed=bytes_accessed),
    )(x, h, W_i, W_h, b_i, b_hn)

    return out if BP == B else out[:B]


def _reference(x, h, params):
    W_ir, W_iz, W_in, W_hr, W_hz, W_hn, b_ir, b_iz, b_in, b_hn = params
    r = jax.nn.sigmoid(x @ W_ir + b_ir + h @ W_hr)
    z = jax.nn.sigmoid(x @ W_iz + b_iz + h @ W_hz)
    n = jnp.tanh(x @ W_in + b_in + r * (h @ W_hn + b_hn))
    return (1.0 - z) * n + z * h


def _init_params(key, input_size, hidden_size):
    """Deterministic init mirroring reset_parameters(): xavier-normal for input
    weights, orthogonal for recurrent weights, zeros for biases."""
    ks = jax.random.split(key, 6)

    def xavier(k, fan_in, fan_out):
        std = jnp.sqrt(2.0 / (fan_in + fan_out))
        # stored as (in_features, out_features) == W^T of the torch Linear
        return jax.random.normal(k, (fan_in, fan_out), jnp.float32) * std

    def orthogonal(k, n):
        a = jax.random.normal(k, (n, n), jnp.float32)
        q, _ = jnp.linalg.qr(a)
        return q

    W_ir = xavier(ks[0], input_size, hidden_size)
    W_iz = xavier(ks[1], input_size, hidden_size)
    W_in = xavier(ks[2], input_size, hidden_size)
    W_hr = orthogonal(ks[3], hidden_size)
    W_hz = orthogonal(ks[4], hidden_size)
    W_hn = orthogonal(ks[5], hidden_size)
    b_ir = jnp.zeros((1, hidden_size), jnp.float32)
    b_iz = jnp.zeros((1, hidden_size), jnp.float32)
    b_in = jnp.zeros((1, hidden_size), jnp.float32)
    b_hn = jnp.zeros((1, hidden_size), jnp.float32)
    return (W_ir, W_iz, W_in, W_hr, W_hz, W_hn, b_ir, b_iz, b_in, b_hn)


if __name__ == "__main__":
    B, INPUT_SIZE, HIDDEN_SIZE = 8, 64, 32

    key = jax.random.PRNGKey(0)
    k_x, k_h, k_p = jax.random.split(key, 3)

    x = jax.random.normal(k_x, (B, INPUT_SIZE), jnp.float32)
    h = jax.random.normal(k_h, (B, HIDDEN_SIZE), jnp.float32)
    params = _init_params(k_p, INPUT_SIZE, HIDDEN_SIZE)
    ref = _reference(x, h, params)

    # f32 weight path: exact match against the module math.
    packed_f32 = pack_gru_params(params, jnp.float32)
    out_f32 = my_gru_cell(x, h, packed_f32)
    jax.block_until_ready(out_f32)
    assert out_f32.shape == (B, HIDDEN_SIZE)
    assert jnp.allclose(out_f32, ref, atol=1e-5, rtol=1e-5)

    # bf16 weight path (production default: MXU-native, half the weight
    # traffic); elementwise math stays f32, so only matmul inputs are rounded.
    packed_bf16 = pack_gru_params(params, jnp.bfloat16)
    out_bf16 = my_gru_cell(x, h, packed_bf16)
    jax.block_until_ready(out_bf16)
    assert out_bf16.shape == (B, HIDDEN_SIZE)
    assert jnp.allclose(out_bf16, ref, atol=5e-2, rtol=5e-2)

    print("KERNEL_OK")
</pallas_src>

<mosaic_0001>
module attributes {stable_mosaic.version = 11 : i64} {
  func.func @gru_cell_kernel(%arg0: i32, %arg1: memref<8x64xf32, #tpu.memory_space<vmem>>, %arg2: memref<8x32xf32, #tpu.memory_space<vmem>>, %arg3: memref<64x128xf32, #tpu.memory_space<vmem>>, %arg4: memref<32x128xf32, #tpu.memory_space<vmem>>, %arg5: memref<1x128xf32, #tpu.memory_space<vmem>>, %arg6: memref<1x32xf32, #tpu.memory_space<vmem>>, %arg7: memref<8x32xf32, #tpu.memory_space<vmem>>) attributes {dimension_semantics = [#tpu.dimension_semantics<parallel>], iteration_bounds = array<i64: 1>, scalar_prefetch = 0 : i64, scratch_operands = 0 : i64, tpu.core_type = #tpu.core_type<tc>, window_params = [{transform_indices = @transform_0, window_bounds = array<i64: 8, 64>}, {transform_indices = @transform_1, window_bounds = array<i64: 8, 32>}, {pipeline_mode = #tpu.pipeline_mode<synchronous>, transform_indices = @transform_2, window_bounds = array<i64: 64, 128>}, {pipeline_mode = #tpu.pipeline_mode<synchronous>, transform_indices = @transform_3, window_bounds = array<i64: 32, 128>}, {pipeline_mode = #tpu.pipeline_mode<synchronous>, transform_indices = @transform_4, window_bounds = array<i64: 1, 128>}, {pipeline_mode = #tpu.pipeline_mode<synchronous>, transform_indices = @transform_5, window_bounds = array<i64: 1, 32>}, {transform_indices = @transform_6, window_bounds = array<i64: 8, 32>}]} {
    %c0 = arith.constant 0 : index
    %c0_0 = arith.constant 0 : index
    %0 = vector.load %arg2[%c0, %c0_0] : memref<8x32xf32, #tpu.memory_space<vmem>>, vector<8x32xf32>
    %c0_1 = arith.constant 0 : index
    %c0_2 = arith.constant 0 : index
    %1 = vector.load %arg1[%c0_1, %c0_2] : memref<8x64xf32, #tpu.memory_space<vmem>>, vector<8x64xf32>
    %c0_3 = arith.constant 0 : index
    %c0_4 = arith.constant 0 : index
    %2 = vector.load %arg3[%c0_3, %c0_4] : memref<64x128xf32, #tpu.memory_space<vmem>>, vector<64x128xf32>
    %cst = arith.constant dense<0.000000e+00> : vector<8x128xf32>
    %3 = tpu.matmul %1, %2, %cst {dimension_numbers = #tpu.dot_dimension_numbers<[1], [0], [0], [1], [0, 0, 1, 1], [], []>} : vector<8x64xf32>, vector<64x128xf32>, vector<8x128xf32> -> vector<8x128xf32>
    %c0_5 = arith.constant 0 : index
    %c0_6 = arith.constant 0 : index
    %4 = vector.load %arg5[%c0_5, %c0_6] : memref<1x128xf32, #tpu.memory_space<vmem>>, vector<1x128xf32>
    %5 = vector.broadcast %4 : vector<1x128xf32> to vector<8x128xf32>
    %6 = arith.addf %3, %5 : vector<8x128xf32>
    %c0_7 = arith.constant 0 : index
    %c0_8 = arith.constant 0 : index
    %7 = vector.load %arg2[%c0_7, %c0_8] : memref<8x32xf32, #tpu.memory_space<vmem>>, vector<8x32xf32>
    %c0_9 = arith.constant 0 : index
    %c0_10 = arith.constant 0 : index
    %8 = vector.load %arg4[%c0_9, %c0_10] : memref<32x128xf32, #tpu.memory_space<vmem>>, vector<32x128xf32>
    %cst_11 = arith.constant dense<0.000000e+00> : vector<8x128xf32>
    %9 = tpu.matmul %7, %8, %cst_11 {dimension_numbers = #tpu.dot_dimension_numbers<[1], [0], [0], [1], [0, 0, 1, 1], [], []>} : vector<8x32xf32>, vector<32x128xf32>, vector<8x128xf32> -> vector<8x128xf32>
    %10 = vector.extract_strided_slice %6 {offsets = [0, 0], sizes = [8, 32], strides = [1, 1]} : vector<8x128xf32> to vector<8x32xf32>
    %11 = vector.extract_strided_slice %9 {offsets = [0, 0], sizes = [8, 32], strides = [1, 1]} : vector<8x128xf32> to vector<8x32xf32>
    %12 = arith.addf %10, %11 : vector<8x32xf32>
    %13 = arith.negf %12 : vector<8x32xf32>
    %14 = math.exp %13 : vector<8x32xf32>
    %cst_12 = arith.constant 1.000000e+00 : f32
    %15 = vector.broadcast %cst_12 : f32 to vector<8x32xf32>
    %16 = arith.addf %15, %14 : vector<8x32xf32>
    %17 = arith.divf %15, %16 : vector<8x32xf32>
    %18 = vector.extract_strided_slice %6 {offsets = [0, 32], sizes = [8, 32], strides = [1, 1]} : vector<8x128xf32> to vector<8x32xf32>
    %19 = vector.extract_strided_slice %9 {offsets = [0, 32], sizes = [8, 32], strides = [1, 1]} : vector<8x128xf32> to vector<8x32xf32>
    %20 = arith.addf %18, %19 : vector<8x32xf32>
    %21 = arith.negf %20 : vector<8x32xf32>
    %22 = math.exp %21 : vector<8x32xf32>
    %cst_13 = arith.constant 1.000000e+00 : f32
    %23 = vector.broadcast %cst_13 : f32 to vector<8x32xf32>
    %24 = arith.addf %23, %22 : vector<8x32xf32>
    %25 = arith.divf %23, %24 : vector<8x32xf32>
    %26 = vector.extract_strided_slice %6 {offsets = [0, 64], sizes = [8, 32], strides = [1, 1]} : vector<8x128xf32> to vector<8x32xf32>
    %27 = vector.extract_strided_slice %9 {offsets = [0, 64], sizes = [8, 32], strides = [1, 1]} : vector<8x128xf32> to vector<8x32xf32>
    %c0_14 = arith.constant 0 : index
    %c0_15 = arith.constant 0 : index
    %28 = vector.load %arg6[%c0_14, %c0_15] : memref<1x32xf32, #tpu.memory_space<vmem>>, vector<1x32xf32>
    %29 = vector.broadcast %28 : vector<1x32xf32> to vector<8x32xf32>
    %30 = arith.addf %27, %29 : vector<8x32xf32>
    %31 = arith.mulf %17, %30 : vector<8x32xf32>
    %32 = arith.addf %26, %31 : vector<8x32xf32>
    %33 = math.tanh %32 : vector<8x32xf32>
    %34 = arith.subf %0, %33 : vector<8x32xf32>
    %35 = arith.mulf %25, %34 : vector<8x32xf32>
    %36 = arith.addf %33, %35 : vector<8x32xf32>
    %c0_16 = arith.constant 0 : index
    %c0_17 = arith.constant 0 : index
    %37 = vector.load %arg7[%c0_16, %c0_17] : memref<8x32xf32, #tpu.memory_space<vmem>>, vector<8x32xf32>
    tpu.vector_store %arg7[%c0_16, %c0_17], %36 {strides = array<i32>} : memref<8x32xf32, #tpu.memory_space<vmem>>, vector<8x32xf32>,
    return
  }
  func.func @transform_0(%arg0: i32) -> (i32, i32) {
    %c0_i32 = arith.constant 0 : i32
    %c0_i32_0 = arith.constant 0 : i32
    return %arg0, %c0_i32 : i32, i32
  }
  func.func @transform_1(%arg0: i32) -> (i32, i32) {
    %c0_i32 = arith.constant 0 : i32
    %c0_i32_0 = arith.constant 0 : i32
    return %arg0, %c0_i32 : i32, i32
  }
  func.func @transform_2(%arg0: i32) -> (i32, i32) {
    %c0_i32 = arith.constant 0 : i32
    %c0_i32_0 = arith.constant 0 : i32
    %c0_i32_1 = arith.constant 0 : i32
    return %c0_i32, %c0_i32_0 : i32, i32
  }
  func.func @transform_3(%arg0: i32) -> (i32, i32) {
    %c0_i32 = arith.constant 0 : i32
    %c0_i32_0 = arith.constant 0 : i32
    %c0_i32_1 = arith.constant 0 : i32
    return %c0_i32, %c0_i32_0 : i32, i32
  }
  func.func @transform_4(%arg0: i32) -> (i32, i32) {
    %c0_i32 = arith.constant 0 : i32
    %c0_i32_0 = arith.constant 0 : i32
    %c0_i32_1 = arith.constant 0 : i32
    return %c0_i32, %c0_i32_0 : i32, i32
  }
  func.func @transform_5(%arg0: i32) -> (i32, i32) {
    %c0_i32 = arith.constant 0 : i32
    %c0_i32_0 = arith.constant 0 : i32
    %c0_i32_1 = arith.constant 0 : i32
    return %c0_i32, %c0_i32_0 : i32, i32
  }
  func.func @transform_6(%arg0: i32) -> (i32, i32) {
    %c0_i32 = arith.constant 0 : i32
    %c0_i32_0 = arith.constant 0 : i32
    return %arg0, %c0_i32 : i32, i32
  }
}

</mosaic_0001>

<llo_original>
// kernel: my_gru_cell.1
$region0: #{my_gru_cell.1}
  #allocation0 [shape = 'u32[]', space=smem, size = 0x4, offset = 0x4, fixed_abs, tag = 'smem constant byte address 0x4 - core index']
  #allocation1 [shape = 'u32[144,128]{1,0:T(1,128)}', space=vmem, size = 0x12000, scoped, tag = 'internal scratch']
  %s0 = inlined_call_operand.hbm [shape: f32[8,64], index: 0, kind: input, shape index: {}]
  %s1 = inlined_call_operand.hbm [shape: f32[8,32], index: 1, kind: input, shape index: {}]
  %s2 = inlined_call_operand.hbm [shape: f32[64,128], index: 2, kind: input, shape index: {}]
  %s3 = inlined_call_operand.hbm [shape: f32[32,128], index: 3, kind: input, shape index: {}]
  %s4 = inlined_call_operand.vmem [shape: f32[1,128], index: 4, kind: input, shape index: {}]
  %s5 = inlined_call_operand.vmem [shape: f32[1,32], index: 5, kind: input, shape index: {}]
  %s6 = inlined_call_operand.hbm [shape: f32[8,32], index: 6, kind: output, shape index: {}]
  %s7 = sld [smem:[#allocation0]]
  $region50: #{my_gru_cell.1} parent=0
    _
  %s9 = ssub.s32 1, %s7
  %s10 = scalar_select 0, %s9, %s7
  $region1: #{my_gru_cell.1} parent=0
    #allocation2 [shape = 'u8[4096]{0}', space=vmem, size = 0x1000, scoped, tag = 'input window, operand 0, single buffered']
    #allocation3 [shape = 's32[1]{0}', space=sflag, size = 0x4, scoped, tag = 'scoped memory for my_gru_cell.1']
    #allocation4 [shape = 's32[1]{0}', space=sflag, size = 0x4, scoped, tag = 'scoped memory for my_gru_cell.1']
    #allocation5 [shape = 'u8[4096]{0}', space=vmem, size = 0x1000, scoped, tag = 'input window, operand 1, single buffered']
    #allocation6 [shape = 's32[1]{0}', space=sflag, size = 0x4, scoped, tag = 'scoped memory for my_gru_cell.1']
    #allocation7 [shape = 'u8[32768]{0}', space=vmem, size = 0x8000, scoped, tag = 'input window, operand 2, single buffered']
    #allocation8 [shape = 'u8[16384]{0}', space=vmem, size = 0x4000, scoped, tag = 'input window, operand 3, single buffered']
    #allocation9 [shape = 's32[1]{0}', space=sflag, size = 0x4, scoped, tag = 'scoped memory for my_gru_cell.1']
    #allocation10 [shape = 'u8[4096]{0}', space=vmem, size = 0x1000, scoped, tag = 'output window, operand 0, single buffered']
    %11 = vsyncpa [#allocation3], 0
    %12 = vsyncpa [#allocation6], 0
    %13 = vsyncpa [#allocation9], 0
    %14 = vsyncpa [#allocation4], 0
    // Predicated region
    $region2: #{my_gru_cell.1} parent=1 // pred_check
      _
    $region3: #{my_gru_cell.1} parent=1 // pred_check_branch
      %16 = sbr.rel (0) target = $region5
    $region4: #{my_gru_cell.1} parent=1 // pred_region
      %s18 = ssub.s32 128, 128
      %19 = vsyncadd [#allocation3], %s18
      %s21 = sshll.u32 [#allocation2], 4
      %s22 = int_to_ptr.vmem [resolvable:$true] %s21
      %24 = dma.hbm_to_vmem [thread:$0]  %s0, 128, %s22, [#allocation3]
    $region5: #{my_gru_cell.1} parent=1 // pred_fallthru
      _
    // Predicated region
    $region6: #{my_gru_cell.1} parent=1 // pred_check
      _
    $region7: #{my_gru_cell.1} parent=1 // pred_check_branch
      %26 = sbr.rel (0) target = $region9
    $region8: #{my_gru_cell.1} parent=1 // pred_region
      %s28 = ssub.s32 128, 128
      %29 = vsyncadd [#allocation6], %s28
      %s31 = sshll.u32 [#allocation5], 4
      %s32 = int_to_ptr.vmem [resolvable:$true] %s31
      %34 = dma.hbm_to_vmem [thread:$0]  %s1, 128, %s32, [#allocation6]
    $region9: #{my_gru_cell.1} parent=1 // pred_fallthru
      _
    // Predicated region
    $region10: #{my_gru_cell.1} parent=1 // pred_check
      _
    $region11: #{my_gru_cell.1} parent=1 // pred_check_branch
      %36 = sbr.rel (0) target = $region13
    $region12: #{my_gru_cell.1} parent=1 // pred_region
      %s38 = ssub.s32 1024, 1024
      %39 = vsyncadd [#allocation6], %s38
      %s40 = sshll.u32 [#allocation7], 4
      %s41 = int_to_ptr.vmem [resolvable:$true] %s40
      %46 = dma.hbm_to_vmem [thread:$0]  %s2, 1024, %s41, [#allocation6], 128, 128, 8
    $region13: #{my_gru_cell.1} parent=1 // pred_fallthru
      _
    // Predicated region
    $region14: #{my_gru_cell.1} parent=1 // pred_check
      _
    $region15: #{my_gru_cell.1} parent=1 // pred_check_branch
      %48 = sbr.rel (0) target = $region17
    $region16: #{my_gru_cell.1} parent=1 // pred_region
      %s50 = ssub.s32 512, 512
      %51 = vsyncadd [#allocation9], %s50
      %s52 = sshll.u32 [#allocation8], 4
      %s53 = int_to_ptr.vmem [resolvable:$true] %s52
      %58 = dma.hbm_to_vmem [thread:$0]  %s3, 512, %s53, [#allocation9], 128, 128, 8
    $region17: #{my_gru_cell.1} parent=1 // pred_fallthru
      _
    // Predicated region
    $region18: #{my_gru_cell.1} parent=1 // pred_check
      _
    $region19: #{my_gru_cell.1} parent=1 // pred_check_branch
      %60 = sbr.rel (0) target = $region21
    $region20: #{my_gru_cell.1} parent=1 // pred_region
      _
    $region21: #{my_gru_cell.1} parent=1 // pred_fallthru
      _
    // Predicated region
    $region22: #{my_gru_cell.1} parent=1 // pred_check
      _
    $region23: #{my_gru_cell.1} parent=1 // pred_check_branch
      %62 = sbr.rel (0) target = $region25
    $region24: #{my_gru_cell.1} parent=1 // pred_region
      _
    $region25: #{my_gru_cell.1} parent=1 // pred_fallthru
      _
    // Predicated region
    $region26: #{my_gru_cell.1} parent=1 // pred_check
      _
    $region27: #{my_gru_cell.1} parent=1 // pred_check_branch
      %64 = sbr.rel (0) target = $region29
    $region28: #{my_gru_cell.1} parent=1 // pred_region
      %65 = dma.done [#allocation3], 128
    $region29: #{my_gru_cell.1} parent=1 // pred_fallthru
      _
    // Predicated region
    $region30: #{my_gru_cell.1} parent=1 // pred_check
      _
    $region31: #{my_gru_cell.1} parent=1 // pred_check_branch
      %67 = sbr.rel (0) target = $region33
    $region32: #{my_gru_cell.1} parent=1 // pred_region
      %68 = dma.done [#allocation6], 128
    $region33: #{my_gru_cell.1} parent=1 // pred_fallthru
      _
    // Predicated region
    $region34: #{my_gru_cell.1} parent=1 // pred_check
      _
    $region35: #{my_gru_cell.1} parent=1 // pred_check_branch
      %70 = sbr.rel (0) target = $region37
    $region36: #{my_gru_cell.1} parent=1 // pred_region
      %71 = dma.done [#allocation6], 1024
    $region37: #{my_gru_cell.1} parent=1 // pred_fallthru
      _
    // Predicated region
    $region38: #{my_gru_cell.1} parent=1 // pred_check
      _
    $region39: #{my_gru_cell.1} parent=1 // pred_check_branch
      %73 = sbr.rel (0) target = $region41
    $region40: #{my_gru_cell.1} parent=1 // pred_region
      %74 = dma.done [#allocation9], 512
    $region41: #{my_gru_cell.1} parent=1 // pred_fallthru
      _
    %v75 = vld [vmem:[#allocation5] sm:$0xff]
    %v76 = vld [vmem:[#allocation2] sm:$0xff]
    %v77 = vld [vmem:[#allocation7] sm:$0xff]
    %v78 = vld [vmem:[#allocation7 + $0x8] sm:$0xff]
    %v79 = vld [vmem:[#allocation7 + $0x10] sm:$0xff]
    %v80 = vld [vmem:[#allocation7 + $0x18] sm:$0xff]
    %v81 = vld [vmem:[#allocation7 + $0x20] sm:$0xff]
    %v82 = vld [vmem:[#allocation7 + $0x28] sm:$0xff]
    %v83 = vld [vmem:[#allocation7 + $0x30] sm:$0xff]
    %v84 = vld [vmem:[#allocation7 + $0x38] sm:$0xff]
    %v85 = vld [vmem:[%s4] sm:$0x1]
    %v87 = vlaneseq
    %v88 = vshrl.u32 %v87, 7
    %v89 = vsub.s32 0, %v88
    %v90 = vrot.slane %v85, %v89
    %vm92 = vcmask 523264
    %v94 = vsel %vm92, %v76, 0
    %96 = vmatprep.subr.mxu0 0.0
    %97 = vmatpush1.msra.mxu0 0.0
    %98 = vmatprep.subr.mxu0 0.0
    %99 = vmatpush1.msra.mxu0 0.0
    %100 = vmatprep.subr.mxu0 0.0
    %101 = vmatpush1.msra.mxu0 0.0
    %102 = vmatprep.subr.mxu0 0.0
    %103 = vmatpush1.msra.mxu0 0.0
    %104 = vmatprep.subr.mxu0 0.0
    %105 = vmatpush1.msra.mxu0 0.0
    %106 = vmatprep.subr.mxu0 0.0
    %107 = vmatpush1.msra.mxu0 0.0
    %108 = vmatprep.subr.mxu0 0.0
    %109 = vmatpush1.msra.mxu0 0.0
    %110 = vmatprep.subr.mxu0 0.0
    %111 = vmatpush1.msra.mxu0 0.0
    %112 = vmatprep.subr.mxu0 0.0
    %113 = vmatpush1.msra.mxu0 %v84
    %114 = vmatprep.subr.mxu0 0.0
    %115 = vmatpush1.msra.mxu0 %v83
    %116 = vmatprep.subr.mxu0 0.0
    %117 = vmatpush1.msra.mxu0 %v82
    %118 = vmatprep.subr.mxu0 0.0
    %119 = vmatpush1.msra.mxu0 %v81
    %120 = vmatprep.subr.mxu0 0.0
    %121 = vmatpush1.msra.mxu0 %v80
    %122 = vmatprep.subr.mxu0 0.0
    %123 = vmatpush1.msra.mxu0 %v79
    %124 = vmatprep.subr.mxu0 0.0
    %125 = vmatpush1.msra.mxu0 %v78
    %126 = vmatprep.subr.mxu0 0.0
    %127 = vmatpush1.msra.mxu0 %v77
    %128 = vmatprep.subr.mxu0 0.0
    %129 = vmatpush2.msra.mxu0 0.0
    %130 = vmatprep.subr.mxu0 0.0
    %131 = vmatpush2.msra.mxu0 0.0
    %132 = vmatprep.subr.mxu0 0.0
    %133 = vmatpush2.msra.mxu0 0.0
    %134 = vmatprep.subr.mxu0 0.0
    %135 = vmatpush2.msra.mxu0 0.0
    %136 = vmatprep.subr.mxu0 0.0
    %137 = vmatpush2.msra.mxu0 0.0
    %138 = vmatprep.subr.mxu0 0.0
    %139 = vmatpush2.msra.mxu0 0.0
    %140 = vmatprep.subr.mxu0 0.0
    %141 = vmatpush2.msra.mxu0 0.0
    %142 = vmatprep.subr.mxu0 0.0
    %143 = vmatpush2.msra.mxu0 0.0
    %144 = vmatprep.subr.mxu0 0.0
    %145 = vmatpush2.msra.mxu0 0.0
    %146 = vmatprep.subr.mxu0 0.0
    %147 = vmatpush2.msra.mxu0 0.0
    %148 = vmatprep.subr.mxu0 0.0
    %149 = vmatpush2.msra.mxu0 0.0
    %150 = vmatprep.subr.mxu0 0.0
    %151 = vmatpush2.msra.mxu0 0.0
    %152 = vmatprep.subr.mxu0 0.0
    %153 = vmatpush2.msra.mxu0 0.0
    %154 = vmatprep.subr.mxu0 0.0
    %155 = vmatpush2.msra.mxu0 0.0
    %156 = vmatprep.subr.mxu0 0.0
    %157 = vmatpush2.msra.mxu0 0.0
    %158 = vmatprep.subr.mxu0 0.0
    %159 = vmatpush2.msra.mxu0 0.0
    %160 = vmatprep.mubr.f32.mxu0 0.0
    %161 = vmatmul.mubr.f32.gmra.mxu0 %v94
    %v162 = vpop.f32.mrf.mxu0
    %v163 = vadd.f32 %v90, %v162
    %v164 = vpop.f32.mrf.mxu0
    %165 = vdwg.mxu0
    %v166 = vld [vmem:[#allocation8] sm:$0xff]
    %v167 = vld [vmem:[#allocation8 + $0x8] sm:$0xff]
    %v168 = vld [vmem:[#allocation8 + $0x10] sm:$0xff]
    %v169 = vld [vmem:[#allocation8 + $0x18] sm:$0xff]
    %vm170 = vcmask 261120
    %v172 = vsel %vm170, %v75, 0
    %174 = vmatprep.subr.mxu0 0.0
    %175 = vmatpush1.msra.mxu0 0.0
    %176 = vmatprep.subr.mxu0 0.0
    %177 = vmatpush1.msra.mxu0 0.0
    %178 = vmatprep.subr.mxu0 0.0
    %179 = vmatpush1.msra.mxu0 0.0
    %180 = vmatprep.subr.mxu0 0.0
    %181 = vmatpush1.msra.mxu0 0.0
    %182 = vmatprep.subr.mxu0 0.0
    %183 = vmatpush1.msra.mxu0 0.0
    %184 = vmatprep.subr.mxu0 0.0
    %185 = vmatpush1.msra.mxu0 0.0
    %186 = vmatprep.subr.mxu0 0.0
    %187 = vmatpush1.msra.mxu0 0.0
    %188 = vmatprep.subr.mxu0 0.0
    %189 = vmatpush1.msra.mxu0 0.0
    %190 = vmatprep.subr.mxu0 0.0
    %191 = vmatpush1.msra.mxu0 0.0
    %192 = vmatprep.subr.mxu0 0.0
    %193 = vmatpush1.msra.mxu0 0.0
    %194 = vmatprep.subr.mxu0 0.0
    %195 = vmatpush1.msra.mxu0 0.0
    %196 = vmatprep.subr.mxu0 0.0
    %197 = vmatpush1.msra.mxu0 0.0
    %198 = vmatprep.subr.mxu0 0.0
    %199 = vmatpush1.msra.mxu0 %v169
    %200 = vmatprep.subr.mxu0 0.0
    %201 = vmatpush1.msra.mxu0 %v168
    %202 = vmatprep.subr.mxu0 0.0
    %203 = vmatpush1.msra.mxu0 %v167
    %204 = vmatprep.subr.mxu0 0.0
    %205 = vmatpush1.msra.mxu0 %v166
    %206 = vmatprep.subr.mxu0 0.0
    %207 = vmatpush2.msra.mxu0 0.0
    %208 = vmatprep.subr.mxu0 0.0
    %209 = vmatpush2.msra.mxu0 0.0
    %210 = vmatprep.subr.mxu0 0.0
    %211 = vmatpush2.msra.mxu0 0.0
    %212 = vmatprep.subr.mxu0 0.0
    %213 = vmatpush2.msra.mxu0 0.0
    %214 = vmatprep.subr.mxu0 0.0
    %215 = vmatpush2.msra.mxu0 0.0
    %216 = vmatprep.subr.mxu0 0.0
    %217 = vmatpush2.msra.mxu0 0.0
    %218 = vmatprep.subr.mxu0 0.0
    %219 = vmatpush2.msra.mxu0 0.0
    %220 = vmatprep.subr.mxu0 0.0
    %221 = vmatpush2.msra.mxu0 0.0
    %222 = vmatprep.subr.mxu0 0.0
    %223 = vmatpush2.msra.mxu0 0.0
    %224 = vmatprep.subr.mxu0 0.0
    %225 = vmatpush2.msra.mxu0 0.0
    %226 = vmatprep.subr.mxu0 0.0
    %227 = vmatpush2.msra.mxu0 0.0
    %228 = vmatprep.subr.mxu0 0.0
    %229 = vmatpush2.msra.mxu0 0.0
    %230 = vmatprep.subr.mxu0 0.0
    %231 = vmatpush2.msra.mxu0 0.0
    %232 = vmatprep.subr.mxu0 0.0
    %233 = vmatpush2.msra.mxu0 0.0
    %234 = vmatprep.subr.mxu0 0.0
    %235 = vmatpush2.msra.mxu0 0.0
    %236 = vmatprep.subr.mxu0 0.0
    %237 = vmatpush2.msra.mxu0 0.0
    %238 = vmatprep.mubr.f32.mxu0 0.0
    %239 = vmatmul.mubr.f32.gmra.mxu0 %v172
    %v240 = vpop.f32.mrf.mxu0
    %v241 = vadd.f32 0.0, %v240
    %v242 = vpop.f32.mrf.mxu0
    %243 = vdwg.mxu0
    %v244 = vadd.f32 %v163, %v241
    %v245 = vxor.u32 %v244, 2147483648
    %v246 = vmul.f32 %v245, 1.442695
    %v247 = vpow.pop %v246
    %v248 = vadd.f32 %v247, 1.0
    %v249 = vrcp.pop %v248
    %v250 = vmul.f32 1.0, %v249
    %v251 = vld [vmem:[%s5] sm:$0x1]
    %v253 = vlaneseq
    %v254 = vshrl.u32 %v253, 7
    %v255 = vsub.s32 0, %v254
    %v256 = vrot.slane %v251, %v255
    %257 = vrot.lane.b32.xlu0 %v256, 64
    %v258 = vpop.permute.xlu0 %257
    %v260 = vadd.f32 %v241, %v258
    %262 = vrot.lane.b32.xlu0 %v260, 64
    %v263 = vpop.permute.xlu0 %262
    %v265 = vmul.f32 %v250, %v263
    %267 = vrot.lane.b32.xlu0 %v265, 64
    %v268 = vpop.permute.xlu0 %267
    %v270 = vadd.f32 %v163, %v268
    %v271 = vtanh.pop %v270
    %273 = vrot.lane.b32.xlu0 %v271, 64
    %v274 = vpop.permute.xlu0 %273
    %v276 = vsub.f32 %v75, %v274
    %278 = vrot.lane.b32.xlu0 %v276, 32
    %v279 = vpop.permute.xlu0 %278
    %v281 = vmul.f32 %v250, %v279
    %283 = vrot.lane.b32.xlu0 %v281, 32
    %v284 = vpop.permute.xlu0 %283
    %v286 = vadd.f32 %v271, %v284
    %288 = vrot.lane.b32.xlu0 %v286, 64
    %v289 = vpop.permute.xlu0 %288
    %291 = vst.msk [vmem:[#allocation10] sm:$0xff] %vm170, %v289
    // Predicated region
    $region42: #{my_gru_cell.1} parent=1 // pred_check
      _
    $region43: #{my_gru_cell.1} parent=1 // pred_check_branch
      %293 = sbr.rel (0) target = $region45
    $region44: #{my_gru_cell.1} parent=1 // pred_region
      %s295 = ssub.s32 128, 128
      %296 = vsyncadd [#allocation4], %s295
      %s298 = sshll.u32 [#allocation10], 4
      %s299 = int_to_ptr.vmem [resolvable:$true] %s298
      %301 = dma.vmem_to_hbm [thread:$0]  %s299, 128, %s6, [#allocation4]
    $region45: #{my_gru_cell.1} parent=1 // pred_fallthru
      _
    // Predicated region
    $region46: #{my_gru_cell.1} parent=1 // pred_check
      _
    $region47: #{my_gru_cell.1} parent=1 // pred_check_branch
      %303 = sbr.rel (0) target = $region49
    $region48: #{my_gru_cell.1} parent=1 // pred_region
      %304 = dma.done [#allocation4], 128
    $region49: #{my_gru_cell.1} parent=1 // pred_fallthru
      _
    %305 = vsyncpa [#allocation3], 1
    %306 = vsyncpa [#allocation6], 1
    %307 = vsyncpa [#allocation9], 1
    %308 = vsyncpa [#allocation4], 1

</llo_original>
